<compile_context>
chip_gen: v7x
topology: tpu7x:2x2x1
jax: 0.10.0
libtpu: 0.0.40
codegen_flags: <defaults>
</compile_context>

<pallas_src>
import jax
import jax.numpy as jnp
from jax.experimental import pallas as pl
from jax.experimental.pallas import tpu as pltpu


_LANE = 128          # vreg lane width (last dim of every block)
_TILE_ROWS = 1024    # sublane rows per tile -> (1024, 128) f32 = 512 KiB / operand block


def _net_x3_kernel(params_ref, x1_ref, x2_ref, o_ref):
    # params_ref (SMEM, f32[4]): [w_up_00, w_up_01, w_down_00, b_down_0]
    w_up0 = params_ref[0]
    w_up1 = params_ref[1]
    w_dn = params_ref[2]
    b_dn = params_ref[3]

    # linear_3_up (no bias) on cat([x1, x2], 1):  z = x1*w00 + x2*w01   (VALU FMAs)
    z = x1_ref[...] * w_up0 + x2_ref[...] * w_up1
    # sigmoid (exp on EUP) then linear_3_down (with bias)
    o_ref[...] = jax.nn.sigmoid(z) * w_dn + b_dn


def _round_up(x, m):
    return ((x + m - 1) // m) * m


def _pack_params(w_up, w_down, b_down):
    """f32[4] = [w_up_00, w_up_01, w_down_00, b_down_0]."""
    return jnp.concatenate(
        [w_up.reshape(-1), w_down.reshape(-1), b_down.reshape(-1)]
    ).astype(jnp.float32)


def _net_x3_reference(x1, x2, w_up, w_down, b_down):
    """Pure-JAX reference (also used as the tiny-batch fast path)."""
    x_cat = jnp.concatenate([x1, x2], axis=1)               # (N, 2)
    return jax.nn.sigmoid(x_cat @ w_up.T) @ w_down.T + b_down


def _net_x3_pallas(x1, x2, params):
    n = x1.shape[0]

    # Pad flat length so it reshapes to a lane-dense (rows, 128) slab with
    # rows a multiple of the tile height (and of 8 for sublane alignment).
    rows = _round_up(pl.cdiv(n, _LANE), 8)
    tile_rows = min(_TILE_ROWS, rows)
    rows = _round_up(rows, tile_rows)
    padded = rows * _LANE

    def lane_dense(x):
        flat = x.reshape(-1).astype(jnp.float32)
        return jnp.pad(flat, (0, padded - n)).reshape(rows, _LANE)

    x1d = lane_dense(x1)
    x2d = lane_dense(x2)

    data_spec = pl.BlockSpec((tile_rows, _LANE), lambda i: (i, 0))

    out = pl.pallas_call(
        _net_x3_kernel,
        out_shape=jax.ShapeDtypeStruct((rows, _LANE), jnp.float32),
        grid=(rows // tile_rows,),
        in_specs=[
            pl.BlockSpec(memory_space=pltpu.SMEM),  # scalar params, untiled
            data_spec,                              # x1 tiles
            data_spec,                              # x2 tiles
        ],
        out_specs=data_spec,
        compiler_params=pltpu.CompilerParams(
            dimension_semantics=("parallel",),      # shard tiles across TCs (v7x)
        ),
    )(params, x1d, x2d)

    # Padding rows are garbage; slice back to (N, 1).
    return out.reshape(-1)[:n].reshape(n, 1)


def net_x3_forward(x1, x2, w_up, w_down, b_down, *, min_pallas_batch=1 << 16):
    """x1, x2: (N, 1) f32.  w_up: (1, 2), w_down: (1, 1), b_down: (1,)."""
    n = x1.shape[0]
    if n < min_pallas_batch:
        # Tiny batch: fused XLA elementwise beats kernel launch + DMA setup.
        return _net_x3_reference(x1, x2, w_up, w_down, b_down)
    return _net_x3_pallas(x1, x2, _pack_params(w_up, w_down, b_down))


def _init_params(key):
    """Deterministic init matching nn.Linear default (uniform +/- 1/sqrt(fan_in))."""
    k1, k2, k3 = jax.random.split(key, 3)
    bound_up = 1.0 / jnp.sqrt(2.0)   # fan_in = 2
    bound_dn = 1.0                   # fan_in = 1
    w_up = jax.random.uniform(k1, (1, 2), jnp.float32, -bound_up, bound_up)
    w_down = jax.random.uniform(k2, (1, 1), jnp.float32, -bound_dn, bound_dn)
    b_down = jax.random.uniform(k3, (1,), jnp.float32, -bound_dn, bound_dn)
    return w_up, w_down, b_down


if __name__ == "__main__":
    key = jax.random.PRNGKey(0)
    kp, kx = jax.random.split(key)
    w_up, w_down, b_down = _init_params(kp)

    # (N, min_pallas_batch): force the Pallas path for the first two cases
    # (one unaligned, one multi-tile), use the tiny-batch fallback for N=8.
    cases = ((1000, 0), (262144, 0), (8, 1 << 16))
    for n, min_batch in cases:
        kx, k1, k2 = jax.random.split(kx, 3)
        x1 = jax.random.normal(k1, (n, 1), jnp.float32)
        x2 = jax.random.normal(k2, (n, 1), jnp.float32)

        out = net_x3_forward(
            x1, x2, w_up, w_down, b_down, min_pallas_batch=min_batch
        )
        out = jax.block_until_ready(out)

        ref = _net_x3_reference(x1, x2, w_up, w_down, b_down)
        assert out.shape == (n, 1)
        assert jnp.allclose(out, ref, atol=1e-5, rtol=1e-5), (n, out, ref)

    print("KERNEL_OK")
</pallas_src>

<mosaic_0001>
module attributes {stable_mosaic.version = 11 : i64} {
  func.func @_net_x3_kernel(%arg0: i32, %arg1: memref<4xf32, #tpu.memory_space<smem>>, %arg2: memref<8x128xf32, #tpu.memory_space<vmem>>, %arg3: memref<8x128xf32, #tpu.memory_space<vmem>>, %arg4: memref<8x128xf32, #tpu.memory_space<vmem>>) attributes {dimension_semantics = [#tpu.dimension_semantics<parallel>], iteration_bounds = array<i64: 1>, scalar_prefetch = 0 : i64, scratch_operands = 0 : i64, tpu.core_type = #tpu.core_type<tc>, window_params = [{transform_indices = @transform_0, window_bounds = array<i64: 4>}, {transform_indices = @transform_1, window_bounds = array<i64: 8, 128>}, {transform_indices = @transform_2, window_bounds = array<i64: 8, 128>}, {transform_indices = @transform_3, window_bounds = array<i64: 8, 128>}]} {
    %c0 = arith.constant 0 : index
    %0 = memref.load %arg1[%c0] : memref<4xf32, #tpu.memory_space<smem>>
    %c1 = arith.constant 1 : index
    %1 = memref.load %arg1[%c1] : memref<4xf32, #tpu.memory_space<smem>>
    %c2 = arith.constant 2 : index
    %2 = memref.load %arg1[%c2] : memref<4xf32, #tpu.memory_space<smem>>
    %c3 = arith.constant 3 : index
    %3 = memref.load %arg1[%c3] : memref<4xf32, #tpu.memory_space<smem>>
    %c0_0 = arith.constant 0 : index
    %c0_1 = arith.constant 0 : index
    %4 = vector.load %arg2[%c0_0, %c0_1] : memref<8x128xf32, #tpu.memory_space<vmem>>, vector<8x128xf32>
    %5 = vector.broadcast %0 : f32 to vector<8x128xf32>
    %6 = arith.mulf %4, %5 : vector<8x128xf32>
    %c0_2 = arith.constant 0 : index
    %c0_3 = arith.constant 0 : index
    %7 = vector.load %arg3[%c0_2, %c0_3] : memref<8x128xf32, #tpu.memory_space<vmem>>, vector<8x128xf32>
    %8 = vector.broadcast %1 : f32 to vector<8x128xf32>
    %9 = arith.mulf %7, %8 : vector<8x128xf32>
    %10 = arith.addf %6, %9 : vector<8x128xf32>
    %11 = arith.negf %10 : vector<8x128xf32>
    %12 = math.exp %11 : vector<8x128xf32>
    %cst = arith.constant 1.000000e+00 : f32
    %13 = vector.broadcast %cst : f32 to vector<8x128xf32>
    %14 = arith.addf %13, %12 : vector<8x128xf32>
    %15 = arith.divf %13, %14 : vector<8x128xf32>
    %16 = vector.broadcast %2 : f32 to vector<8x128xf32>
    %17 = arith.mulf %15, %16 : vector<8x128xf32>
    %18 = vector.broadcast %3 : f32 to vector<8x128xf32>
    %19 = arith.addf %17, %18 : vector<8x128xf32>
    %c0_4 = arith.constant 0 : index
    %c0_5 = arith.constant 0 : index
    %20 = vector.load %arg4[%c0_4, %c0_5] : memref<8x128xf32, #tpu.memory_space<vmem>>, vector<8x128xf32>
    tpu.vector_store %arg4[%c0_4, %c0_5], %19 {strides = array<i32>} : memref<8x128xf32, #tpu.memory_space<vmem>>, vector<8x128xf32>,
    return
  }
  func.func @transform_0(%arg0: i32) -> i32 {
    %c0_i32 = arith.constant 0 : i32
    %c0_i32_0 = arith.constant 0 : i32
    return %c0_i32 : i32
  }
  func.func @transform_1(%arg0: i32) -> (i32, i32) {
    %c0_i32 = arith.constant 0 : i32
    %c0_i32_0 = arith.constant 0 : i32
    return %arg0, %c0_i32 : i32, i32
  }
  func.func @transform_2(%arg0: i32) -> (i32, i32) {
    %c0_i32 = arith.constant 0 : i32
    %c0_i32_0 = arith.constant 0 : i32
    return %arg0, %c0_i32 : i32, i32
  }
  func.func @transform_3(%arg0: i32) -> (i32, i32) {
    %c0_i32 = arith.constant 0 : i32
    %c0_i32_0 = arith.constant 0 : i32
    return %arg0, %c0_i32 : i32, i32
  }
}

</mosaic_0001>

<llo_original>
// kernel: tpu_custom_call.1
$region0: #{tpu_custom_call.1}
  #allocation0 [shape = 'u32[]', space=smem, size = 0x4, offset = 0x4, fixed_abs, tag = 'smem constant byte address 0x4 - core index']
  #allocation1 [shape = 'u32[144,128]{1,0:T(1,128)}', space=vmem, size = 0x12000, scoped, tag = 'internal scratch']
  %s0 = inlined_call_operand.hbm [shape: f32[4], index: 0, kind: input, shape index: {}]
  %s1 = inlined_call_operand.hbm [shape: f32[8,128], index: 1, kind: input, shape index: {}]
  %s2 = inlined_call_operand.hbm [shape: f32[8,128], index: 2, kind: input, shape index: {}]
  %s3 = inlined_call_operand.hbm [shape: f32[8,128], index: 3, kind: output, shape index: {}]
  %s4 = sld [smem:[#allocation0]]
  $region34: #{tpu_custom_call.1} parent=0
    _
  %s6 = ssub.s32 1, %s4
  %s7 = scalar_select 0, %s6, %s4
  $region1: #{tpu_custom_call.1} parent=0
    #allocation2 [shape = 'u8[512]{0}', space=smem, size = 0x200, scoped, tag = 'input window, operand 0, single buffered']
    #allocation3 [shape = 's32[1]{0}', space=sflag, size = 0x4, scoped, tag = 'scoped memory for tpu_custom_call.1']
    #allocation4 [shape = 's32[1]{0}', space=sflag, size = 0x4, scoped, tag = 'scoped memory for tpu_custom_call.1']
    #allocation5 [shape = 's32[1]{0}', space=sflag, size = 0x4, scoped, tag = 'scoped memory for tpu_custom_call.1']
    #allocation6 [shape = 'u8[4096]{0}', space=vmem, size = 0x1000, scoped, tag = 'input window, operand 1, single buffered']
    #allocation7 [shape = 'u8[4096]{0}', space=vmem, size = 0x1000, scoped, tag = 'input window, operand 2, single buffered']
    #allocation8 [shape = 's32[1]{0}', space=sflag, size = 0x4, scoped, tag = 'scoped memory for tpu_custom_call.1']
    #allocation9 [shape = 'u8[4096]{0}', space=vmem, size = 0x1000, scoped, tag = 'output window, operand 0, single buffered']
    %8 = vsyncpa [#allocation5], 0
    %9 = vsyncpa [#allocation3], 0
    %10 = vsyncpa [#allocation8], 0
    %11 = vsyncpa [#allocation4], 0
    // Predicated region
    $region2: #{tpu_custom_call.1} parent=1 // pred_check
      _
    $region3: #{tpu_custom_call.1} parent=1 // pred_check_branch
      %13 = sbr.rel (0) target = $region5
    $region4: #{tpu_custom_call.1} parent=1 // pred_region
      %s15 = ssub.s32 16, 16
      %16 = vsyncadd [#allocation5], %s15
      %19 = dma.hbm_to_smem %s0, 16, [#allocation2], [#allocation5]
    $region5: #{tpu_custom_call.1} parent=1 // pred_fallthru
      _
    // Predicated region
    $region6: #{tpu_custom_call.1} parent=1 // pred_check
      _
    $region7: #{tpu_custom_call.1} parent=1 // pred_check_branch
      %21 = sbr.rel (0) target = $region9
    $region8: #{tpu_custom_call.1} parent=1 // pred_region
      %s23 = ssub.s32 128, 128
      %24 = vsyncadd [#allocation3], %s23
      %s26 = sshll.u32 [#allocation6], 4
      %s27 = int_to_ptr.vmem [resolvable:$true] %s26
      %29 = dma.hbm_to_vmem [thread:$0]  %s1, 128, %s27, [#allocation3]
    $region9: #{tpu_custom_call.1} parent=1 // pred_fallthru
      _
    // Predicated region
    $region10: #{tpu_custom_call.1} parent=1 // pred_check
      _
    $region11: #{tpu_custom_call.1} parent=1 // pred_check_branch
      %31 = sbr.rel (0) target = $region13
    $region12: #{tpu_custom_call.1} parent=1 // pred_region
      %s33 = ssub.s32 128, 128
      %34 = vsyncadd [#allocation8], %s33
      %s36 = sshll.u32 [#allocation7], 4
      %s37 = int_to_ptr.vmem [resolvable:$true] %s36
      %39 = dma.hbm_to_vmem [thread:$0]  %s2, 128, %s37, [#allocation8]
    $region13: #{tpu_custom_call.1} parent=1 // pred_fallthru
      _
    // Predicated region
    $region14: #{tpu_custom_call.1} parent=1 // pred_check
      _
    $region15: #{tpu_custom_call.1} parent=1 // pred_check_branch
      %41 = sbr.rel (0) target = $region17
    $region16: #{tpu_custom_call.1} parent=1 // pred_region
      %42 = dma.done [#allocation5], 16
    $region17: #{tpu_custom_call.1} parent=1 // pred_fallthru
      _
    // Predicated region
    $region18: #{tpu_custom_call.1} parent=1 // pred_check
      _
    $region19: #{tpu_custom_call.1} parent=1 // pred_check_branch
      %44 = sbr.rel (0) target = $region21
    $region20: #{tpu_custom_call.1} parent=1 // pred_region
      %45 = dma.done [#allocation3], 128
    $region21: #{tpu_custom_call.1} parent=1 // pred_fallthru
      _
    // Predicated region
    $region22: #{tpu_custom_call.1} parent=1 // pred_check
      _
    $region23: #{tpu_custom_call.1} parent=1 // pred_check_branch
      %47 = sbr.rel (0) target = $region25
    $region24: #{tpu_custom_call.1} parent=1 // pred_region
      %48 = dma.done [#allocation8], 128
    $region25: #{tpu_custom_call.1} parent=1 // pred_fallthru
      _
    %49 = sfence
    %s50 = sld [smem:[#allocation2]]
    %s51 = sld [smem:[#allocation2 + $0x1]]
    %s52 = sld [smem:[#allocation2 + $0x2]]
    %s53 = sld [smem:[#allocation2 + $0x3]]
    %v54 = vld [vmem:[#allocation6] sm:$0xff]
    %v55 = vstv %s50
    %v56 = vmul.f32 %v54, %v55
    %v57 = vld [vmem:[#allocation7] sm:$0xff]
    %v58 = vstv %s51
    %v59 = vmul.f32 %v57, %v58
    %v60 = vadd.f32 %v56, %v59
    %v61 = vxor.u32 %v60, 2147483648
    %v62 = vmul.f32 %v61, 1.442695
    %v63 = vpow.pop %v62
    %v64 = vadd.f32 %v63, 1.0
    %v65 = vrcp.pop %v64
    %v66 = vmul.f32 1.0, %v65
    %v67 = vstv %s52
    %v68 = vmul.f32 %v66, %v67
    %v69 = vstv %s53
    %v70 = vadd.f32 %v68, %v69
    %71 = vst [vmem:[#allocation9] sm:$0xff] %v70
    // Predicated region
    $region26: #{tpu_custom_call.1} parent=1 // pred_check
      _
    $region27: #{tpu_custom_call.1} parent=1 // pred_check_branch
      %73 = sbr.rel (0) target = $region29
    $region28: #{tpu_custom_call.1} parent=1 // pred_region
      %s75 = ssub.s32 128, 128
      %76 = vsyncadd [#allocation4], %s75
      %s78 = sshll.u32 [#allocation9], 4
      %s79 = int_to_ptr.vmem [resolvable:$true] %s78
      %81 = dma.vmem_to_hbm [thread:$0]  %s79, 128, %s3, [#allocation4]
    $region29: #{tpu_custom_call.1} parent=1 // pred_fallthru
      _
    // Predicated region
    $region30: #{tpu_custom_call.1} parent=1 // pred_check
      _
    $region31: #{tpu_custom_call.1} parent=1 // pred_check_branch
      %83 = sbr.rel (0) target = $region33
    $region32: #{tpu_custom_call.1} parent=1 // pred_region
      %84 = dma.done [#allocation4], 128
    $region33: #{tpu_custom_call.1} parent=1 // pred_fallthru
      _
    %85 = vsyncpa [#allocation3], 1
    %86 = vsyncpa [#allocation8], 1
    %87 = vsyncpa [#allocation4], 1
    %88 = vsyncpa [#allocation5], 1

</llo_original>
